<compile_context>
chip_gen: v7x
topology: tpu7x:2x2x1
jax: 0.10.0
libtpu: 0.0.40
codegen_flags: <defaults>
</compile_context>

<pallas_src>
import functools

import jax
import jax.numpy as jnp
from jax.experimental import pallas as pl
from jax.experimental.pallas import tpu as pltpu


def _round_up(n, m):
    return (n + m - 1) // m * m


def _cdiv(n, m):
    return (n + m - 1) // m


def _mlp_kernel(x_ref, w1_ref, b1_ref, w2_ref, b2_ref, o_ref):
    # x_ref:  (tile_r, NB_LANES)               packed / lane-dense rows
    # w1_ref: (NB_LANES, HD_LANES)  b1_ref: (1, HD_LANES)
    # w2_ref: (HD_LANES, NB_LANES)  b2_ref: (1, NB_LANES)
    x = x_ref[...]
    h = jnp.dot(x, w1_ref[...], preferred_element_type=jnp.float32) + b1_ref[...]
    h = jnp.tanh(h)                                    # EUP, f32 (v5e-safe)
    y = jnp.dot(h, w2_ref[...], preferred_element_type=jnp.float32) + b2_ref[...]
    o_ref[...] = y.astype(o_ref.dtype)


def prepare_params(w1, b1, w2, b2):
    """One-time (outside jit) repack of the MLP weights into lane-dense,
    block-diagonal form matching the packed activation layout.

    w1: [num_basis, hidden]   b1: [1, hidden]
    w2: [hidden, num_basis]   b2: [1, num_basis]
    (weights stored [in, out], i.e. transposed w.r.t. PyTorch's [out, in])
    """
    num_basis, hidden = w1.shape
    # `pack` consecutive batch rows share one 128-lane vector row.
    pack = 128 // num_basis if 128 % num_basis == 0 else 1
    nb_lanes = _round_up(pack * num_basis, 128)
    hd_lanes = _round_up(pack * hidden, 128)

    eye = jnp.eye(pack, dtype=w1.dtype)
    w1_blk = jnp.kron(eye, w1)                 # (pack*nb, pack*hd) block-diag
    w2_blk = jnp.kron(eye, w2)                 # (pack*hd, pack*nb) block-diag
    b1_blk = jnp.tile(b1, (1, pack))           # (1, pack*hd)
    b2_blk = jnp.tile(b2, (1, pack))           # (1, pack*nb)

    # Zero-pad to lane-dense multiples of 128.  Mathematically transparent:
    # zero weight rows/cols + zero bias -> tanh(0)=0 -> zero contribution.
    w1_blk = jnp.pad(w1_blk, ((0, nb_lanes - pack * num_basis),
                              (0, hd_lanes - pack * hidden)))
    w2_blk = jnp.pad(w2_blk, ((0, hd_lanes - pack * hidden),
                              (0, nb_lanes - pack * num_basis)))
    b1_blk = jnp.pad(b1_blk, ((0, 0), (0, hd_lanes - pack * hidden)))
    b2_blk = jnp.pad(b2_blk, ((0, 0), (0, nb_lanes - pack * num_basis)))

    return dict(w1=w1_blk, b1=b1_blk, w2=w2_blk, b2=b2_blk,
                num_basis=num_basis, hidden=hidden, pack=pack)


_MAX_TILE_ROWS = 1024            # packed (128-lane) rows per grid step
_VMEM_TILE_TARGET = 40 * 2**20   # stay well under v7x's 64 MiB physical VMEM


def _vmem_estimate(tile_r, nb_lanes, hd_lanes, itemsize=4):
    x_buf = 2 * tile_r * nb_lanes * itemsize            # double-buffered x tile
    o_buf = 2 * tile_r * nb_lanes * itemsize            # double-buffered out tile
    w_buf = 2 * (2 * nb_lanes * hd_lanes + hd_lanes + nb_lanes) * itemsize
    tmp = tile_r * (hd_lanes + nb_lanes) * itemsize      # h / y intermediates
    return x_buf + o_buf + w_buf + tmp


@functools.partial(jax.jit,
                   static_argnames=("num_basis", "pack", "max_tile_rows"))
def _forward_impl(x, w1_blk, b1_blk, w2_blk, b2_blk, *,
                  num_basis, pack, max_tile_rows):
    batch, nb = x.shape
    assert nb == num_basis
    nb_lanes, hd_lanes = w1_blk.shape
    # Zero-copy packing possible when pack rows exactly fill the lane dim
    # (i.e. num_basis divides 128, or is itself a multiple of 128).
    lane_packed = (pack * num_basis == nb_lanes)

    rows_needed = _cdiv(batch, pack) if lane_packed else batch
    rows_needed = max(rows_needed, 1)

    # Tile choice: one big tile for small problems, max_tile_rows otherwise,
    # shrunk only if the (feature-dim dependent) VMEM footprint gets too big.
    tile_r = min(rows_needed, max_tile_rows)
    while tile_r > 8 and _vmem_estimate(tile_r, nb_lanes, hd_lanes) > _VMEM_TILE_TARGET:
        tile_r = max(8, _round_up(tile_r // 2, 8))
    if tile_r < rows_needed:
        tile_r = _round_up(tile_r, 8)        # multi-tile: sublane-aligned (f32)
    rows_p = _round_up(rows_needed, tile_r)

    if lane_packed:
        batch_p = rows_p * pack
        if batch_p != batch:                 # thin [*, num_basis] pad only
            x = jnp.pad(x, ((0, batch_p - batch), (0, 0)))
        x_in = x.reshape(rows_p, nb_lanes)   # contiguous => metadata only
    else:
        # Fallback (num_basis neither divides nor is a multiple of 128):
        # classic lane padding of the activation.
        x_in = jnp.pad(x, ((0, rows_p - batch), (0, nb_lanes - nb)))

    num_tiles = rows_p // tile_r

    # Batch axis is independent -> always "parallel" (v7x dual TensorCore).
    cp_kwargs = dict(dimension_semantics=("parallel",))
    est = _vmem_estimate(tile_r, nb_lanes, hd_lanes)
    if est > 12 * 2**20:                     # only for large feature dims
        cp_kwargs["vmem_limit_bytes"] = int(min(max(est * 5 // 4, 32 * 2**20),
                                                64 * 2**20))

    out = pl.pallas_call(
        _mlp_kernel,
        out_shape=jax.ShapeDtypeStruct((rows_p, nb_lanes), x.dtype),
        grid_spec=pl.GridSpec(
            grid=(num_tiles,),
            in_specs=[
                pl.BlockSpec((tile_r, nb_lanes), lambda i: (i, 0)),    # x tile
                pl.BlockSpec((nb_lanes, hd_lanes), lambda i: (0, 0)),  # W1 (resident)
                pl.BlockSpec((1, hd_lanes), lambda i: (0, 0)),         # b1 (resident)
                pl.BlockSpec((hd_lanes, nb_lanes), lambda i: (0, 0)),  # W2 (resident)
                pl.BlockSpec((1, nb_lanes), lambda i: (0, 0)),         # b2 (resident)
            ],
            out_specs=pl.BlockSpec((tile_r, nb_lanes), lambda i: (i, 0)),
        ),
        compiler_params=pltpu.CompilerParams(**cp_kwargs),
    )(x_in, w1_blk, b1_blk, w2_blk, b2_blk)

    if lane_packed:
        y = out.reshape(rows_p * pack, num_basis)   # contiguous => metadata only
        return y[:batch]
    return out[:batch, :num_basis]


def neural_ode_forward(t, x, params, max_tile_rows=_MAX_TILE_ROWS):
    """Pallas implementation of NeuralODE.forward(t, x). `t` is ignored."""
    del t
    return _forward_impl(x, params["w1"], params["b1"], params["w2"], params["b2"],
                         num_basis=params["num_basis"], pack=params["pack"],
                         max_tile_rows=max_tile_rows)


def init_params(key, num_basis, hidden_dim, dtype=jnp.float32):
    """Mimics PyTorch nn.Linear default init (U[-1/sqrt(fan_in), 1/sqrt(fan_in)])."""
    k1, k2, k3, k4 = jax.random.split(key, 4)
    bound1 = 1.0 / jnp.sqrt(num_basis)
    bound2 = 1.0 / jnp.sqrt(hidden_dim)
    # Stored as [in, out] (transpose of PyTorch's [out, in]).
    w1 = jax.random.uniform(k1, (num_basis, hidden_dim), dtype, -bound1, bound1)
    b1 = jax.random.uniform(k2, (1, hidden_dim), dtype, -bound1, bound1)
    w2 = jax.random.uniform(k3, (hidden_dim, num_basis), dtype, -bound2, bound2)
    b2 = jax.random.uniform(k4, (1, num_basis), dtype, -bound2, bound2)
    return w1, b1, w2, b2


if __name__ == "__main__":
    num_basis = 8
    hidden_dim = 32
    batch = 16

    key = jax.random.PRNGKey(0)
    kx, kp = jax.random.split(key)
    x = jax.random.normal(kx, (batch, num_basis), dtype=jnp.float32)
    t = jnp.float32(0.0)                      # ignored by forward, kept for API parity
    w1, b1, w2, b2 = init_params(kp, num_basis, hidden_dim)
    params = prepare_params(w1, b1, w2, b2)   # one-time weight repack (outside jit)

    def ref_fn(xx):
        return jnp.tanh(xx @ w1 + b1) @ w2 + b2

    # Small batch: single grid step, pure zero-copy reshape (no padding at all).
    out = jax.block_until_ready(neural_ode_forward(t, x, params))
    assert out.shape == (batch, num_basis)
    assert jnp.allclose(out, ref_fn(x), atol=1e-4, rtol=1e-4)

    # Odd batch (exercises the thin row-padding path).
    x_odd = jax.random.normal(kx, (5, num_basis), dtype=jnp.float32)
    out_odd = jax.block_until_ready(neural_ode_forward(t, x_odd, params))
    assert out_odd.shape == (5, num_basis)
    assert jnp.allclose(out_odd, ref_fn(x_odd), atol=1e-4, rtol=1e-4)

    # Larger batch (exercises the multi-tile "parallel" grid path).
    x_big = jax.random.normal(kx, (20000, num_basis), dtype=jnp.float32)
    out_big = jax.block_until_ready(neural_ode_forward(t, x_big, params))
    assert out_big.shape == (20000, num_basis)
    assert jnp.allclose(out_big, ref_fn(x_big), atol=1e-4, rtol=1e-4)

    print("KERNEL_OK")
</pallas_src>

<mosaic_0001>
module attributes {stable_mosaic.version = 11 : i64} {
  func.func @_mlp_kernel(%arg0: i32, %arg1: memref<1x128xf32, #tpu.memory_space<vmem>>, %arg2: memref<128x512xf32, #tpu.memory_space<vmem>>, %arg3: memref<1x512xf32, #tpu.memory_space<vmem>>, %arg4: memref<512x128xf32, #tpu.memory_space<vmem>>, %arg5: memref<1x128xf32, #tpu.memory_space<vmem>>, %arg6: memref<1x128xf32, #tpu.memory_space<vmem>>) attributes {dimension_semantics = [#tpu.dimension_semantics<parallel>], iteration_bounds = array<i64: 1>, scalar_prefetch = 0 : i64, scratch_operands = 0 : i64, tpu.core_type = #tpu.core_type<tc>, window_params = [{transform_indices = @transform_0, window_bounds = array<i64: 1, 128>}, {pipeline_mode = #tpu.pipeline_mode<synchronous>, transform_indices = @transform_1, window_bounds = array<i64: 128, 512>}, {pipeline_mode = #tpu.pipeline_mode<synchronous>, transform_indices = @transform_2, window_bounds = array<i64: 1, 512>}, {pipeline_mode = #tpu.pipeline_mode<synchronous>, transform_indices = @transform_3, window_bounds = array<i64: 512, 128>}, {pipeline_mode = #tpu.pipeline_mode<synchronous>, transform_indices = @transform_4, window_bounds = array<i64: 1, 128>}, {transform_indices = @transform_5, window_bounds = array<i64: 1, 128>}]} {
    %c0 = arith.constant 0 : index
    %c0_0 = arith.constant 0 : index
    %0 = vector.load %arg1[%c0, %c0_0] : memref<1x128xf32, #tpu.memory_space<vmem>>, vector<1x128xf32>
    %c0_1 = arith.constant 0 : index
    %c0_2 = arith.constant 0 : index
    %1 = vector.load %arg2[%c0_1, %c0_2] : memref<128x512xf32, #tpu.memory_space<vmem>>, vector<128x512xf32>
    %cst = arith.constant dense<0.000000e+00> : vector<1x512xf32>
    %2 = tpu.matmul %0, %1, %cst {dimension_numbers = #tpu.dot_dimension_numbers<[1], [0], [0], [1], [0, 0, 1, 1], [], []>} : vector<1x128xf32>, vector<128x512xf32>, vector<1x512xf32> -> vector<1x512xf32>
    %c0_3 = arith.constant 0 : index
    %c0_4 = arith.constant 0 : index
    %3 = vector.load %arg3[%c0_3, %c0_4] : memref<1x512xf32, #tpu.memory_space<vmem>>, vector<1x512xf32>
    %4 = arith.addf %2, %3 : vector<1x512xf32>
    %5 = math.tanh %4 : vector<1x512xf32>
    %c0_5 = arith.constant 0 : index
    %c0_6 = arith.constant 0 : index
    %6 = vector.load %arg4[%c0_5, %c0_6] : memref<512x128xf32, #tpu.memory_space<vmem>>, vector<512x128xf32>
    %cst_7 = arith.constant dense<0.000000e+00> : vector<1x128xf32>
    %7 = tpu.matmul %5, %6, %cst_7 {dimension_numbers = #tpu.dot_dimension_numbers<[1], [0], [0], [1], [0, 0, 1, 1], [], []>} : vector<1x512xf32>, vector<512x128xf32>, vector<1x128xf32> -> vector<1x128xf32>
    %c0_8 = arith.constant 0 : index
    %c0_9 = arith.constant 0 : index
    %8 = vector.load %arg5[%c0_8, %c0_9] : memref<1x128xf32, #tpu.memory_space<vmem>>, vector<1x128xf32>
    %9 = arith.addf %7, %8 : vector<1x128xf32>
    %c0_10 = arith.constant 0 : index
    %c0_11 = arith.constant 0 : index
    %10 = vector.load %arg6[%c0_10, %c0_11] : memref<1x128xf32, #tpu.memory_space<vmem>>, vector<1x128xf32>
    tpu.vector_store %arg6[%c0_10, %c0_11], %9 {strides = array<i32>} : memref<1x128xf32, #tpu.memory_space<vmem>>, vector<1x128xf32>,
    return
  }
  func.func @transform_0(%arg0: i32) -> (i32, i32) {
    %c0_i32 = arith.constant 0 : i32
    %c0_i32_0 = arith.constant 0 : i32
    return %arg0, %c0_i32 : i32, i32
  }
  func.func @transform_1(%arg0: i32) -> (i32, i32) {
    %c0_i32 = arith.constant 0 : i32
    %c0_i32_0 = arith.constant 0 : i32
    %c0_i32_1 = arith.constant 0 : i32
    return %c0_i32, %c0_i32_0 : i32, i32
  }
  func.func @transform_2(%arg0: i32) -> (i32, i32) {
    %c0_i32 = arith.constant 0 : i32
    %c0_i32_0 = arith.constant 0 : i32
    %c0_i32_1 = arith.constant 0 : i32
    return %c0_i32, %c0_i32_0 : i32, i32
  }
  func.func @transform_3(%arg0: i32) -> (i32, i32) {
    %c0_i32 = arith.constant 0 : i32
    %c0_i32_0 = arith.constant 0 : i32
    %c0_i32_1 = arith.constant 0 : i32
    return %c0_i32, %c0_i32_0 : i32, i32
  }
  func.func @transform_4(%arg0: i32) -> (i32, i32) {
    %c0_i32 = arith.constant 0 : i32
    %c0_i32_0 = arith.constant 0 : i32
    %c0_i32_1 = arith.constant 0 : i32
    return %c0_i32, %c0_i32_0 : i32, i32
  }
  func.func @transform_5(%arg0: i32) -> (i32, i32) {
    %c0_i32 = arith.constant 0 : i32
    %c0_i32_0 = arith.constant 0 : i32
    return %arg0, %c0_i32 : i32, i32
  }
}

</mosaic_0001>

<llo_original>
// kernel: _forward_impl.1
$region0: #{_forward_impl.1}
  #allocation0 [shape = 'u32[]', space=smem, size = 0x4, offset = 0x4, fixed_abs, tag = 'smem constant byte address 0x4 - core index']
  #allocation1 [shape = 'u32[144,128]{1,0:T(1,128)}', space=vmem, size = 0x12000, scoped, tag = 'internal scratch']
  %s0 = inlined_call_operand.vmem [shape: f32[1,128], index: 0, kind: input, shape index: {}]
  %s1 = inlined_call_operand.hbm [shape: f32[128,512], index: 1, kind: input, shape index: {}]
  %s2 = inlined_call_operand.vmem [shape: f32[1,512], index: 2, kind: input, shape index: {}]
  %s3 = inlined_call_operand.hbm [shape: f32[512,128], index: 3, kind: input, shape index: {}]
  %s4 = inlined_call_operand.vmem [shape: f32[1,128], index: 4, kind: input, shape index: {}]
  %s5 = inlined_call_operand.vmem [shape: f32[1,128], index: 5, kind: output, shape index: {}]
  %s6 = sld [smem:[#allocation0]]
  $region38: #{_forward_impl.1} parent=0
    _
  %s8 = ssub.s32 1, %s6
  %s9 = scalar_select 0, %s8, %s6
  $region1: #{_forward_impl.1} parent=0
    #allocation2 [shape = 'u8[262144]{0}', space=vmem, size = 0x40000, scoped, tag = 'input window, operand 1, single buffered']
    #allocation3 [shape = 's32[1]{0}', space=sflag, size = 0x4, scoped, tag = 'scoped memory for _forward_impl.1']
    #allocation4 [shape = 'u8[262144]{0}', space=vmem, size = 0x40000, scoped, tag = 'input window, operand 3, single buffered']
    #allocation5 [shape = 's32[1]{0}', space=sflag, size = 0x4, scoped, tag = 'scoped memory for _forward_impl.1']
    %10 = vsyncpa [#allocation3], 0
    %11 = vsyncpa [#allocation5], 0
    // Predicated region
    $region2: #{_forward_impl.1} parent=1 // pred_check
      _
    $region3: #{_forward_impl.1} parent=1 // pred_check_branch
      %13 = sbr.rel (0) target = $region5
    $region4: #{_forward_impl.1} parent=1 // pred_region
      _
    $region5: #{_forward_impl.1} parent=1 // pred_fallthru
      _
    // Predicated region
    $region6: #{_forward_impl.1} parent=1 // pred_check
      _
    $region7: #{_forward_impl.1} parent=1 // pred_check_branch
      %15 = sbr.rel (0) target = $region9
    $region8: #{_forward_impl.1} parent=1 // pred_region
      %s17 = ssub.s32 8192, 8192
      %18 = vsyncadd [#allocation3], %s17
      %s19 = sshll.u32 [#allocation2], 4
      %s20 = int_to_ptr.vmem [resolvable:$true] %s19
      %25 = dma.hbm_to_vmem [thread:$0]  %s1, 8192, %s20, [#allocation3], 512, 512, 32
    $region9: #{_forward_impl.1} parent=1 // pred_fallthru
      _
    // Predicated region
    $region10: #{_forward_impl.1} parent=1 // pred_check
      _
    $region11: #{_forward_impl.1} parent=1 // pred_check_branch
      %27 = sbr.rel (0) target = $region13
    $region12: #{_forward_impl.1} parent=1 // pred_region
      _
    $region13: #{_forward_impl.1} parent=1 // pred_fallthru
      _
    // Predicated region
    $region14: #{_forward_impl.1} parent=1 // pred_check
      _
    $region15: #{_forward_impl.1} parent=1 // pred_check_branch
      %29 = sbr.rel (0) target = $region17
    $region16: #{_forward_impl.1} parent=1 // pred_region
      %s31 = ssub.s32 8192, 8192
      %32 = vsyncadd [#allocation5], %s31
      %s33 = sshll.u32 [#allocation4], 4
      %s34 = int_to_ptr.vmem [resolvable:$true] %s33
      %39 = dma.hbm_to_vmem [thread:$0]  %s3, 8192, %s34, [#allocation5], 128, 128, 8
    $region17: #{_forward_impl.1} parent=1 // pred_fallthru
      _
    // Predicated region
    $region18: #{_forward_impl.1} parent=1 // pred_check
      _
    $region19: #{_forward_impl.1} parent=1 // pred_check_branch
      %41 = sbr.rel (0) target = $region21
    $region20: #{_forward_impl.1} parent=1 // pred_region
      _
    $region21: #{_forward_impl.1} parent=1 // pred_fallthru
      _
    // Predicated region
    $region22: #{_forward_impl.1} parent=1 // pred_check
      _
    $region23: #{_forward_impl.1} parent=1 // pred_check_branch
      %43 = sbr.rel (0) target = $region25
    $region24: #{_forward_impl.1} parent=1 // pred_region
      %44 = dma.done [#allocation3], 8192
    $region25: #{_forward_impl.1} parent=1 // pred_fallthru
      _
    // Predicated region
    $region26: #{_forward_impl.1} parent=1 // pred_check
      _
    $region27: #{_forward_impl.1} parent=1 // pred_check_branch
      %46 = sbr.rel (0) target = $region29
    $region28: #{_forward_impl.1} parent=1 // pred_region
      %47 = dma.done [#allocation5], 8192
    $region29: #{_forward_impl.1} parent=1 // pred_fallthru
      _
    %v48 = vld [vmem:[%s0] sm:$0x1]
    %v49 = vld [vmem:[#allocation2] sm:$0xff]
    %v50 = vld [vmem:[#allocation2 + $0x8] sm:$0xff]
    %v51 = vld [vmem:[#allocation2 + $0x10] sm:$0xff]
    %v52 = vld [vmem:[#allocation2 + $0x18] sm:$0xff]
    %v53 = vld [vmem:[#allocation2 + $0x20] sm:$0xff]
    %v54 = vld [vmem:[#allocation2 + $0x28] sm:$0xff]
    %v55 = vld [vmem:[#allocation2 + $0x30] sm:$0xff]
    %v56 = vld [vmem:[#allocation2 + $0x38] sm:$0xff]
    %v57 = vld [vmem:[#allocation2 + $0x40] sm:$0xff]
    %v58 = vld [vmem:[#allocation2 + $0x48] sm:$0xff]
    %v59 = vld [vmem:[#allocation2 + $0x50] sm:$0xff]
    %v60 = vld [vmem:[#allocation2 + $0x58] sm:$0xff]
    %v61 = vld [vmem:[#allocation2 + $0x60] sm:$0xff]
    %v62 = vld [vmem:[#allocation2 + $0x68] sm:$0xff]
    %v63 = vld [vmem:[#allocation2 + $0x70] sm:$0xff]
    %v64 = vld [vmem:[#allocation2 + $0x78] sm:$0xff]
    %v65 = vld [vmem:[#allocation2 + $0x80] sm:$0xff]
    %v66 = vld [vmem:[#allocation2 + $0x88] sm:$0xff]
    %v67 = vld [vmem:[#allocation2 + $0x90] sm:$0xff]
    %v68 = vld [vmem:[#allocation2 + $0x98] sm:$0xff]
    %v69 = vld [vmem:[#allocation2 + $0xa0] sm:$0xff]
    %v70 = vld [vmem:[#allocation2 + $0xa8] sm:$0xff]
    %v71 = vld [vmem:[#allocation2 + $0xb0] sm:$0xff]
    %v72 = vld [vmem:[#allocation2 + $0xb8] sm:$0xff]
    %v73 = vld [vmem:[#allocation2 + $0xc0] sm:$0xff]
    %v74 = vld [vmem:[#allocation2 + $0xc8] sm:$0xff]
    %v75 = vld [vmem:[#allocation2 + $0xd0] sm:$0xff]
    %v76 = vld [vmem:[#allocation2 + $0xd8] sm:$0xff]
    %v77 = vld [vmem:[#allocation2 + $0xe0] sm:$0xff]
    %v78 = vld [vmem:[#allocation2 + $0xe8] sm:$0xff]
    %v79 = vld [vmem:[#allocation2 + $0xf0] sm:$0xff]
    %v80 = vld [vmem:[#allocation2 + $0xf8] sm:$0xff]
    %v81 = vld [vmem:[#allocation2 + $0x100] sm:$0xff]
    %v82 = vld [vmem:[#allocation2 + $0x108] sm:$0xff]
    %v83 = vld [vmem:[#allocation2 + $0x110] sm:$0xff]
    %v84 = vld [vmem:[#allocation2 + $0x118] sm:$0xff]
    %v85 = vld [vmem:[#allocation2 + $0x120] sm:$0xff]
    %v86 = vld [vmem:[#allocation2 + $0x128] sm:$0xff]
    %v87 = vld [vmem:[#allocation2 + $0x130] sm:$0xff]
    %v88 = vld [vmem:[#allocation2 + $0x138] sm:$0xff]
    %v89 = vld [vmem:[#allocation2 + $0x140] sm:$0xff]
    %v90 = vld [vmem:[#allocation2 + $0x148] sm:$0xff]
    %v91 = vld [vmem:[#allocation2 + $0x150] sm:$0xff]
    %v92 = vld [vmem:[#allocation2 + $0x158] sm:$0xff]
    %v93 = vld [vmem:[#allocation2 + $0x160] sm:$0xff]
    %v94 = vld [vmem:[#allocation2 + $0x168] sm:$0xff]
    %v95 = vld [vmem:[#allocation2 + $0x170] sm:$0xff]
    %v96 = vld [vmem:[#allocation2 + $0x178] sm:$0xff]
    %v97 = vld [vmem:[#allocation2 + $0x180] sm:$0xff]
    %v98 = vld [vmem:[#allocation2 + $0x188] sm:$0xff]
    %v99 = vld [vmem:[#allocation2 + $0x190] sm:$0xff]
    %v100 = vld [vmem:[#allocation2 + $0x198] sm:$0xff]
    %v101 = vld [vmem:[#allocation2 + $0x1a0] sm:$0xff]
    %v102 = vld [vmem:[#allocation2 + $0x1a8] sm:$0xff]
    %v103 = vld [vmem:[#allocation2 + $0x1b0] sm:$0xff]
    %v104 = vld [vmem:[#allocation2 + $0x1b8] sm:$0xff]
    %v105 = vld [vmem:[#allocation2 + $0x1c0] sm:$0xff]
    %v106 = vld [vmem:[#allocation2 + $0x1c8] sm:$0xff]
    %v107 = vld [vmem:[#allocation2 + $0x1d0] sm:$0xff]
    %v108 = vld [vmem:[#allocation2 + $0x1d8] sm:$0xff]
    %v109 = vld [vmem:[#allocation2 + $0x1e0] sm:$0xff]
    %v110 = vld [vmem:[#allocation2 + $0x1e8] sm:$0xff]
    %v111 = vld [vmem:[#allocation2 + $0x1f0] sm:$0xff]
    %v112 = vld [vmem:[#allocation2 + $0x1f8] sm:$0xff]
    %v113 = vld [vmem:[%s2] sm:$0xf]
    %v115 = vlaneseq
    %v116 = vshrl.u32 %v115, 7
    %v117 = vsub.s32 0, %v116
    %v118 = vrot.slane %v113, %v117
    %v119 = vlaneseq
    %v120 = vshrl.u32 %v119, 7
    %v121 = vsub.s32 1, %v120
    %v122 = vrot.slane %v113, %v121
    %v123 = vlaneseq
    %v124 = vshrl.u32 %v123, 7
    %v125 = vsub.s32 2, %v124
    %v126 = vrot.slane %v113, %v125
    %v127 = vlaneseq
    %v128 = vshrl.u32 %v127, 7
    %v129 = vsub.s32 3, %v128
    %v130 = vrot.slane %v113, %v129
    %135 = vmatprep.subr.mxu0 %v50
    %136 = vmatpush1.msra.mxu0 %v49
    %137 = vmatprep.subr.mxu0 %v54
    %138 = vmatpush1.msra.mxu0 %v53
    %139 = vmatprep.subr.mxu0 %v58
    %140 = vmatpush1.msra.mxu0 %v57
    %141 = vmatprep.subr.mxu0 %v62
    %142 = vmatpush1.msra.mxu0 %v61
    %143 = vmatprep.subr.mxu0 %v66
    %144 = vmatpush1.msra.mxu0 %v65
    %145 = vmatprep.subr.mxu0 %v70
    %146 = vmatpush1.msra.mxu0 %v69
    %147 = vmatprep.subr.mxu0 %v74
    %148 = vmatpush1.msra.mxu0 %v73
    %149 = vmatprep.subr.mxu0 %v78
    %150 = vmatpush1.msra.mxu0 %v77
    %151 = vmatprep.subr.mxu0 %v82
    %152 = vmatpush1.msra.mxu0 %v81
    %153 = vmatprep.subr.mxu0 %v86
    %154 = vmatpush1.msra.mxu0 %v85
    %155 = vmatprep.subr.mxu0 %v90
    %156 = vmatpush1.msra.mxu0 %v89
    %157 = vmatprep.subr.mxu0 %v94
    %158 = vmatpush1.msra.mxu0 %v93
    %159 = vmatprep.subr.mxu0 %v98
    %160 = vmatpush1.msra.mxu0 %v97
    %161 = vmatprep.subr.mxu0 %v102
    %162 = vmatpush1.msra.mxu0 %v101
    %163 = vmatprep.subr.mxu0 %v106
    %164 = vmatpush1.msra.mxu0 %v105
    %165 = vmatprep.subr.mxu0 %v110
    %166 = vmatpush1.msra.mxu0 %v109
    %167 = vmatprep.subr.mxu0 0.0
    %168 = vmatpush1.msra.mxu0 0.0
    %169 = vmatprep.subr.mxu0 0.0
    %170 = vmatpush1.msra.mxu0 0.0
    %171 = vmatprep.subr.mxu0 0.0
    %172 = vmatpush1.msra.mxu0 0.0
    %173 = vmatprep.subr.mxu0 0.0
    %174 = vmatpush1.msra.mxu0 0.0
    %175 = vmatprep.subr.mxu0 0.0
    %176 = vmatpush1.msra.mxu0 0.0
    %177 = vmatprep.subr.mxu0 0.0
    %178 = vmatpush1.msra.mxu0 0.0
    %179 = vmatprep.subr.mxu0 0.0
    %180 = vmatpush1.msra.mxu0 0.0
    %181 = vmatprep.subr.mxu0 0.0
    %182 = vmatpush1.msra.mxu0 0.0
    %183 = vmatprep.subr.mxu0 0.0
    %184 = vmatpush1.msra.mxu0 0.0
    %185 = vmatprep.subr.mxu0 0.0
    %186 = vmatpush1.msra.mxu0 0.0
    %187 = vmatprep.subr.mxu0 0.0
    %188 = vmatpush1.msra.mxu0 0.0
    %189 = vmatprep.subr.mxu0 0.0
    %190 = vmatpush1.msra.mxu0 0.0
    %191 = vmatprep.subr.mxu0 0.0
    %192 = vmatpush1.msra.mxu0 0.0
    %193 = vmatprep.subr.mxu0 0.0
    %194 = vmatpush1.msra.mxu0 0.0
    %195 = vmatprep.subr.mxu0 0.0
    %196 = vmatpush1.msra.mxu0 0.0
    %197 = vmatprep.subr.mxu0 0.0
    %198 = vmatpush1.msra.mxu0 0.0
    %199 = vmatprep.mubr.f32.mxu0 0.0
    %200 = vmatmul.mubr.f32.gmra.mrb[0].mxu0 %v48
    %v201 = vpop.f32.mrb[0].mxu0
    %v202 = vadd.f32 %v118, %v201
    %v203 = vpop.f32.mrb[0].mxu0
    %v204 = vadd.f32 %v122, %v203
    %205 = vdwg.mxu0
    %206 = vmatprep.subr.mxu0 %v52
    %207 = vmatpush1.msra.mxu0 %v51
    %208 = vmatprep.subr.mxu0 %v56
    %209 = vmatpush1.msra.mxu0 %v55
    %210 = vmatprep.subr.mxu0 %v60
    %211 = vmatpush1.msra.mxu0 %v59
    %212 = vmatprep.subr.mxu0 %v64
    %213 = vmatpush1.msra.mxu0 %v63
    %214 = vmatprep.subr.mxu0 %v68
    %215 = vmatpush1.msra.mxu0 %v67
    %216 = vmatprep.subr.mxu0 %v72
    %217 = vmatpush1.msra.mxu0 %v71
    %218 = vmatprep.subr.mxu0 %v76
    %219 = vmatpush1.msra.mxu0 %v75
    %220 = vmatprep.subr.mxu0 %v80
    %221 = vmatpush1.msra.mxu0 %v79
    %222 = vmatprep.subr.mxu0 %v84
    %223 = vmatpush1.msra.mxu0 %v83
    %224 = vmatprep.subr.mxu0 %v88
    %225 = vmatpush1.msra.mxu0 %v87
    %226 = vmatprep.subr.mxu0 %v92
    %227 = vmatpush1.msra.mxu0 %v91
    %228 = vmatprep.subr.mxu0 %v96
    %229 = vmatpush1.msra.mxu0 %v95
    %230 = vmatprep.subr.mxu0 %v100
    %231 = vmatpush1.msra.mxu0 %v99
    %232 = vmatprep.subr.mxu0 %v104
    %233 = vmatpush1.msra.mxu0 %v103
    %234 = vmatprep.subr.mxu0 %v108
    %235 = vmatpush1.msra.mxu0 %v107
    %236 = vmatprep.subr.mxu0 %v112
    %237 = vmatpush1.msra.mxu0 %v111
    %238 = vmatprep.subr.mxu0 0.0
    %239 = vmatpush1.msra.mxu0 0.0
    %240 = vmatprep.subr.mxu0 0.0
    %241 = vmatpush1.msra.mxu0 0.0
    %242 = vmatprep.subr.mxu0 0.0
    %243 = vmatpush1.msra.mxu0 0.0
    %244 = vmatprep.subr.mxu0 0.0
    %245 = vmatpush1.msra.mxu0 0.0
    %246 = vmatprep.subr.mxu0 0.0
    %247 = vmatpush1.msra.mxu0 0.0
    %248 = vmatprep.subr.mxu0 0.0
    %249 = vmatpush1.msra.mxu0 0.0
    %250 = vmatprep.subr.mxu0 0.0
    %251 = vmatpush1.msra.mxu0 0.0
    %252 = vmatprep.subr.mxu0 0.0
    %253 = vmatpush1.msra.mxu0 0.0
    %254 = vmatprep.subr.mxu0 0.0
    %255 = vmatpush1.msra.mxu0 0.0
    %256 = vmatprep.subr.mxu0 0.0
    %257 = vmatpush1.msra.mxu0 0.0
    %258 = vmatprep.subr.mxu0 0.0
    %259 = vmatpush1.msra.mxu0 0.0
    %260 = vmatprep.subr.mxu0 0.0
    %261 = vmatpush1.msra.mxu0 0.0
    %262 = vmatprep.subr.mxu0 0.0
    %263 = vmatpush1.msra.mxu0 0.0
    %264 = vmatprep.subr.mxu0 0.0
    %265 = vmatpush1.msra.mxu0 0.0
    %266 = vmatprep.subr.mxu0 0.0
    %267 = vmatpush1.msra.mxu0 0.0
    %268 = vmatprep.subr.mxu0 0.0
    %269 = vmatpush1.msra.mxu0 0.0
    %270 = vmatprep.mubr.f32.mxu0 0.0
    %271 = vmatmul.mubr.f32.gmra.mrb[0].mxu0 %v48
    %v272 = vpop.f32.mrb[0].mxu0
    %v273 = vadd.f32 %v126, %v272
    %v274 = vpop.f32.mrb[0].mxu0
    %v275 = vadd.f32 %v130, %v274
    %276 = vdwg.mxu0
    %v277 = vtanh.pop %v202
    %v278 = vtanh.pop %v204
    %v279 = vtanh.pop %v273
    %v280 = vtanh.pop %v275
    %v281 = vld [vmem:[#allocation4] sm:$0xff]
    %v282 = vld [vmem:[#allocation4 + $0x8] sm:$0xff]
    %v283 = vld [vmem:[#allocation4 + $0x10] sm:$0xff]
    %v284 = vld [vmem:[#allocation4 + $0x18] sm:$0xff]
    %v285 = vld [vmem:[#allocation4 + $0x20] sm:$0xff]
    %v286 = vld [vmem:[#allocation4 + $0x28] sm:$0xff]
    %v287 = vld [vmem:[#allocation4 + $0x30] sm:$0xff]
    %v288 = vld [vmem:[#allocation4 + $0x38] sm:$0xff]
    %v289 = vld [vmem:[#allocation4 + $0x40] sm:$0xff]
    %v290 = vld [vmem:[#allocation4 + $0x48] sm:$0xff]
    %v291 = vld [vmem:[#allocation4 + $0x50] sm:$0xff]
    %v292 = vld [vmem:[#allocation4 + $0x58] sm:$0xff]
    %v293 = vld [vmem:[#allocation4 + $0x60] sm:$0xff]
    %v294 = vld [vmem:[#allocation4 + $0x68] sm:$0xff]
    %v295 = vld [vmem:[#allocation4 + $0x70] sm:$0xff]
    %v296 = vld [vmem:[#allocation4 + $0x78] sm:$0xff]
    %v297 = vld [vmem:[#allocation4 + $0x80] sm:$0xff]
    %v298 = vld [vmem:[#allocation4 + $0x88] sm:$0xff]
    %v299 = vld [vmem:[#allocation4 + $0x90] sm:$0xff]
    %v300 = vld [vmem:[#allocation4 + $0x98] sm:$0xff]
    %v301 = vld [vmem:[#allocation4 + $0xa0] sm:$0xff]
    %v302 = vld [vmem:[#allocation4 + $0xa8] sm:$0xff]
    %v303 = vld [vmem:[#allocation4 + $0xb0] sm:$0xff]
    %v304 = vld [vmem:[#allocation4 + $0xb8] sm:$0xff]
    %v305 = vld [vmem:[#allocation4 + $0xc0] sm:$0xff]
    %v306 = vld [vmem:[#allocation4 + $0xc8] sm:$0xff]
    %v307 = vld [vmem:[#allocation4 + $0xd0] sm:$0xff]
    %v308 = vld [vmem:[#allocation4 + $0xd8] sm:$0xff]
    %v309 = vld [vmem:[#allocation4 + $0xe0] sm:$0xff]
    %v310 = vld [vmem:[#allocation4 + $0xe8] sm:$0xff]
    %v311 = vld [vmem:[#allocation4 + $0xf0] sm:$0xff]
    %v312 = vld [vmem:[#allocation4 + $0xf8] sm:$0xff]
    %v313 = vld [vmem:[#allocation4 + $0x100] sm:$0xff]
    %v314 = vld [vmem:[#allocation4 + $0x108] sm:$0xff]
    %v315 = vld [vmem:[#allocation4 + $0x110] sm:$0xff]
    %v316 = vld [vmem:[#allocation4 + $0x118] sm:$0xff]
    %v317 = vld [vmem:[#allocation4 + $0x120] sm:$0xff]
    %v318 = vld [vmem:[#allocation4 + $0x128] sm:$0xff]
    %v319 = vld [vmem:[#allocation4 + $0x130] sm:$0xff]
    %v320 = vld [vmem:[#allocation4 + $0x138] sm:$0xff]
    %v321 = vld [vmem:[#allocation4 + $0x140] sm:$0xff]
    %v322 = vld [vmem:[#allocation4 + $0x148] sm:$0xff]
    %v323 = vld [vmem:[#allocation4 + $0x150] sm:$0xff]
    %v324 = vld [vmem:[#allocation4 + $0x158] sm:$0xff]
    %v325 = vld [vmem:[#allocation4 + $0x160] sm:$0xff]
    %v326 = vld [vmem:[#allocation4 + $0x168] sm:$0xff]
    %v327 = vld [vmem:[#allocation4 + $0x170] sm:$0xff]
    %v328 = vld [vmem:[#allocation4 + $0x178] sm:$0xff]
    %v329 = vld [vmem:[#allocation4 + $0x180] sm:$0xff]
    %v330 = vld [vmem:[#allocation4 + $0x188] sm:$0xff]
    %v331 = vld [vmem:[#allocation4 + $0x190] sm:$0xff]
    %v332 = vld [vmem:[#allocation4 + $0x198] sm:$0xff]
    %v333 = vld [vmem:[#allocation4 + $0x1a0] sm:$0xff]
    %v334 = vld [vmem:[#allocation4 + $0x1a8] sm:$0xff]
    %v335 = vld [vmem:[#allocation4 + $0x1b0] sm:$0xff]
    %v336 = vld [vmem:[#allocation4 + $0x1b8] sm:$0xff]
    %v337 = vld [vmem:[#allocation4 + $0x1c0] sm:$0xff]
    %v338 = vld [vmem:[#allocation4 + $0x1c8] sm:$0xff]
    %v339 = vld [vmem:[#allocation4 + $0x1d0] sm:$0xff]
    %v340 = vld [vmem:[#allocation4 + $0x1d8] sm:$0xff]
    %v341 = vld [vmem:[#allocation4 + $0x1e0] sm:$0xff]
    %v342 = vld [vmem:[#allocation4 + $0x1e8] sm:$0xff]
    %v343 = vld [vmem:[#allocation4 + $0x1f0] sm:$0xff]
    %v344 = vld [vmem:[#allocation4 + $0x1f8] sm:$0xff]
    %v345 = vld [vmem:[%s4] sm:$0x1]
    %346 = vmatprep.subr.mxu0 0.0
    %347 = vmatpush1.msra.mxu0 %v281
    %348 = vmatprep.subr.mxu0 0.0
    %349 = vmatpush1.msra.mxu0 %v282
    %350 = vmatprep.subr.mxu0 0.0
    %351 = vmatpush1.msra.mxu0 %v283
    %352 = vmatprep.subr.mxu0 0.0
    %353 = vmatpush1.msra.mxu0 %v284
    %354 = vmatprep.subr.mxu0 0.0
    %355 = vmatpush1.msra.mxu0 %v285
    %356 = vmatprep.subr.mxu0 0.0
    %357 = vmatpush1.msra.mxu0 %v286
    %358 = vmatprep.subr.mxu0 0.0
    %359 = vmatpush1.msra.mxu0 %v287
    %360 = vmatprep.subr.mxu0 0.0
    %361 = vmatpush1.msra.mxu0 %v288
    %362 = vmatprep.subr.mxu0 0.0
    %363 = vmatpush1.msra.mxu0 %v289
    %364 = vmatprep.subr.mxu0 0.0
    %365 = vmatpush1.msra.mxu0 %v290
    %366 = vmatprep.subr.mxu0 0.0
    %367 = vmatpush1.msra.mxu0 %v291
    %368 = vmatprep.subr.mxu0 0.0
    %369 = vmatpush1.msra.mxu0 %v292
    %370 = vmatprep.subr.mxu0 0.0
    %371 = vmatpush1.msra.mxu0 %v293
    %372 = vmatprep.subr.mxu0 0.0
    %373 = vmatpush1.msra.mxu0 %v294
    %374 = vmatprep.subr.mxu0 0.0
    %375 = vmatpush1.msra.mxu0 %v295
    %376 = vmatprep.subr.mxu0 0.0
    %377 = vmatpush1.msra.mxu0 %v296
    %378 = vmatprep.subr.mxu0 0.0
    %379 = vmatpush1.msra.mxu0 %v297
    %380 = vmatprep.subr.mxu0 0.0
    %381 = vmatpush1.msra.mxu0 %v298
    %382 = vmatprep.subr.mxu0 0.0
    %383 = vmatpush1.msra.mxu0 %v299
    %384 = vmatprep.subr.mxu0 0.0
    %385 = vmatpush1.msra.mxu0 %v300
    %386 = vmatprep.subr.mxu0 0.0
    %387 = vmatpush1.msra.mxu0 %v301
    %388 = vmatprep.subr.mxu0 0.0
    %389 = vmatpush1.msra.mxu0 %v302
    %390 = vmatprep.subr.mxu0 0.0
    %391 = vmatpush1.msra.mxu0 %v303
    %392 = vmatprep.subr.mxu0 0.0
    %393 = vmatpush1.msra.mxu0 %v304
    %394 = vmatprep.subr.mxu0 0.0
    %395 = vmatpush1.msra.mxu0 %v305
    %396 = vmatprep.subr.mxu0 0.0
    %397 = vmatpush1.msra.mxu0 %v306
    %398 = vmatprep.subr.mxu0 0.0
    %399 = vmatpush1.msra.mxu0 %v307
    %400 = vmatprep.subr.mxu0 0.0
    %401 = vmatpush1.msra.mxu0 %v308
    %402 = vmatprep.subr.mxu0 0.0
    %403 = vmatpush1.msra.mxu0 %v309
    %404 = vmatprep.subr.mxu0 0.0
    %405 = vmatpush1.msra.mxu0 %v310
    %406 = vmatprep.subr.mxu0 0.0
    %407 = vmatpush1.msra.mxu0 %v311
    %408 = vmatprep.subr.mxu0 0.0
    %409 = vmatpush1.msra.mxu0 %v312
    %410 = vmatprep.mubr.f32.mxu0 %v278
    %411 = vmatmul.mubr.f32.gmra.mrb[0].mxu0 %v277
    %v412 = vpop.f32.mrb[0].mxu0
    %v413 = vadd.f32 %v345, %v412
    %v414 = vpop.f32.mrb[0].mxu0
    %415 = vdwg.mxu0
    %416 = vmatprep.subr.mxu0 0.0
    %417 = vmatpush1.msra.mxu0 %v313
    %418 = vmatprep.subr.mxu0 0.0
    %419 = vmatpush1.msra.mxu0 %v314
    %420 = vmatprep.subr.mxu0 0.0
    %421 = vmatpush1.msra.mxu0 %v315
    %422 = vmatprep.subr.mxu0 0.0
    %423 = vmatpush1.msra.mxu0 %v316
    %424 = vmatprep.subr.mxu0 0.0
    %425 = vmatpush1.msra.mxu0 %v317
    %426 = vmatprep.subr.mxu0 0.0
    %427 = vmatpush1.msra.mxu0 %v318
    %428 = vmatprep.subr.mxu0 0.0
    %429 = vmatpush1.msra.mxu0 %v319
    %430 = vmatprep.subr.mxu0 0.0
    %431 = vmatpush1.msra.mxu0 %v320
    %432 = vmatprep.subr.mxu0 0.0
    %433 = vmatpush1.msra.mxu0 %v321
    %434 = vmatprep.subr.mxu0 0.0
    %435 = vmatpush1.msra.mxu0 %v322
    %436 = vmatprep.subr.mxu0 0.0
    %437 = vmatpush1.msra.mxu0 %v323
    %438 = vmatprep.subr.mxu0 0.0
    %439 = vmatpush1.msra.mxu0 %v324
    %440 = vmatprep.subr.mxu0 0.0
    %441 = vmatpush1.msra.mxu0 %v325
    %442 = vmatprep.subr.mxu0 0.0
    %443 = vmatpush1.msra.mxu0 %v326
    %444 = vmatprep.subr.mxu0 0.0
    %445 = vmatpush1.msra.mxu0 %v327
    %446 = vmatprep.subr.mxu0 0.0
    %447 = vmatpush1.msra.mxu0 %v328
    %448 = vmatprep.subr.mxu0 0.0
    %449 = vmatpush1.msra.mxu0 %v329
    %450 = vmatprep.subr.mxu0 0.0
    %451 = vmatpush1.msra.mxu0 %v330
    %452 = vmatprep.subr.mxu0 0.0
    %453 = vmatpush1.msra.mxu0 %v331
    %454 = vmatprep.subr.mxu0 0.0
    %455 = vmatpush1.msra.mxu0 %v332
    %456 = vmatprep.subr.mxu0 0.0
    %457 = vmatpush1.msra.mxu0 %v333
    %458 = vmatprep.subr.mxu0 0.0
    %459 = vmatpush1.msra.mxu0 %v334
    %460 = vmatprep.subr.mxu0 0.0
    %461 = vmatpush1.msra.mxu0 %v335
    %462 = vmatprep.subr.mxu0 0.0
    %463 = vmatpush1.msra.mxu0 %v336
    %464 = vmatprep.subr.mxu0 0.0
    %465 = vmatpush1.msra.mxu0 %v337
    %466 = vmatprep.subr.mxu0 0.0
    %467 = vmatpush1.msra.mxu0 %v338
    %468 = vmatprep.subr.mxu0 0.0
    %469 = vmatpush1.msra.mxu0 %v339
    %470 = vmatprep.subr.mxu0 0.0
    %471 = vmatpush1.msra.mxu0 %v340
    %472 = vmatprep.subr.mxu0 0.0
    %473 = vmatpush1.msra.mxu0 %v341
    %474 = vmatprep.subr.mxu0 0.0
    %475 = vmatpush1.msra.mxu0 %v342
    %476 = vmatprep.subr.mxu0 0.0
    %477 = vmatpush1.msra.mxu0 %v343
    %478 = vmatprep.subr.mxu0 0.0
    %479 = vmatpush1.msra.mxu0 %v344
    %480 = vmatprep.mubr.f32.mxu0 %v280
    %481 = vmatmul.mubr.f32.gmra.mrb[0].mxu0 %v279
    %v482 = vpop.f32.mrb[0].mxu0
    %v483 = vadd.f32 %v413, %v482
    %v484 = vpop.f32.mrb[0].mxu0
    %485 = vdwg.mxu0
    %486 = vst [vmem:[%s5] sm:$0x1] %v483
    // Predicated region
    $region30: #{_forward_impl.1} parent=1 // pred_check
      _
    $region31: #{_forward_impl.1} parent=1 // pred_check_branch
      %488 = sbr.rel (0) target = $region33
    $region32: #{_forward_impl.1} parent=1 // pred_region
      _
    $region33: #{_forward_impl.1} parent=1 // pred_fallthru
      _
    // Predicated region
    $region34: #{_forward_impl.1} parent=1 // pred_check
      _
    $region35: #{_forward_impl.1} parent=1 // pred_check_branch
      %490 = sbr.rel (0) target = $region37
    $region36: #{_forward_impl.1} parent=1 // pred_region
      _
    $region37: #{_forward_impl.1} parent=1 // pred_fallthru
      _
    %491 = vsyncpa [#allocation3], 1
    %492 = vsyncpa [#allocation5], 1

</llo_original>
